<compile_context>
chip_gen: v6e
topology: v6e:2x2x1
jax: 0.10.0
libtpu: 0.0.40
codegen_flags: <defaults>
</compile_context>

<pallas_src>
import functools

import jax
import jax.numpy as jnp
from jax.experimental import pallas as pl
from jax.experimental.pallas import tpu as pltpu

IN_FEATURES = 2048


def _round_up(x, m):
    return ((x + m - 1) // m) * m


def _fc_kernel(x_ref, w_ref, b_ref, o_ref):
    # x_ref: (tm, K) f32   w_ref: (tn, K) f32 (torch layout)   b_ref: (1, tn) f32
    # o_ref: (tm, tn) f32
    x_bf = x_ref[...].astype(jnp.bfloat16)
    w_bf = w_ref[...].astype(jnp.bfloat16)
    # Contract dim 1 of both operands == x @ W.T without materializing a transpose.
    acc = jax.lax.dot_general(
        x_bf,
        w_bf,
        dimension_numbers=(((1,), (1,)), ((), ())),
        preferred_element_type=jnp.float32,
    )
    o_ref[...] = (acc + b_ref[...]).astype(o_ref.dtype)


@jax.jit
def fc_forward(x, w, b):
    """Pallas FC head: y = x @ w.T + b (torch nn.Linear semantics).

    x: (B, 2048) f32, w: (N, 2048) f32 (torch layout), b: (N,) f32 -> (B, N) f32.
    """
    B, K = x.shape
    N, K2 = w.shape
    assert K == IN_FEATURES and K2 == IN_FEATURES

    # ---- batch tiling: pad B only to the f32 sublane multiple (8). ----
    B_pad = _round_up(B, 8)
    if B_pad <= 256:
        tm = B_pad
    else:
        tm = 8
        for cand in (256, 128, 64, 32, 16, 8):
            if B_pad % cand == 0:
                tm = cand
                break

    # ---- class tiling: unpadded single tile for classifier-sized heads; for very
    #      wide heads prefer a 128-multiple tile that divides N (no W padding). ----
    if N <= 1024:
        tn, N_pad = N, N
    else:
        tn, N_pad = 512, _round_up(N, 512)
        for cand in (1024, 512, 256, 128):
            if N % cand == 0:
                tn, N_pad = cand, N
                break

    x_p = x
    if B_pad != B:
        x_p = jnp.zeros((B_pad, K), x.dtype).at[:B, :].set(x)

    w_p = w
    b_p = b.reshape(1, N)
    if N_pad != N:
        # Rare (N > 1024 and not 128-divisible). If W is static, hoist this pad out
        # of the hot path by padding the parameter once at model-build time.
        w_p = jnp.zeros((N_pad, K), w.dtype).at[:N, :].set(w)
        b_p = jnp.zeros((1, N_pad), b.dtype).at[0, :N].set(b)

    grid = (B_pad // tm, N_pad // tn)

    cost = pl.CostEstimate(
        flops=2 * B_pad * K * N_pad,
        transcendentals=0,
        bytes_accessed=(B_pad * K + N_pad * K + N_pad + B_pad * N_pad) * 4,
    )

    out = pl.pallas_call(
        _fc_kernel,
        out_shape=jax.ShapeDtypeStruct((B_pad, N_pad), jnp.float32),
        grid_spec=pltpu.PrefetchScalarGridSpec(
            num_scalar_prefetch=0,
            grid=grid,
            in_specs=[
                pl.BlockSpec((tm, K), lambda i, j: (i, 0)),   # x row-tile (f32)
                pl.BlockSpec((tn, K), lambda i, j: (j, 0)),   # W row-tile, torch (N,K) layout
                pl.BlockSpec((1, tn), lambda i, j: (0, j)),   # bias tile
            ],
            out_specs=pl.BlockSpec((tm, tn), lambda i, j: (i, j)),
        ),
        compiler_params=pltpu.CompilerParams(
            dimension_semantics=("parallel", "parallel"),
            vmem_limit_bytes=32 * 1024 * 1024,
        ),
        cost_estimate=cost,
    )(x_p, w_p, b_p)

    if B_pad != B or N_pad != N:
        out = out[:B, :N]
    return out


def _check(batch, num_class, key):
    kx, kw, kb = jax.random.split(key, 3)
    bound = 1.0 / (IN_FEATURES ** 0.5)
    w = jax.random.uniform(
        kw, (num_class, IN_FEATURES), jnp.float32, minval=-bound, maxval=bound
    )
    b = jax.random.uniform(kb, (num_class,), jnp.float32, minval=-bound, maxval=bound)
    x = jax.random.normal(kx, (batch, IN_FEATURES), jnp.float32)

    out = jax.block_until_ready(fc_forward(x, w, b))
    assert out.shape == (batch, num_class)

    # Reference 1: same bf16-operand math in plain JAX (tight tolerance).
    x_bf = x.astype(jnp.bfloat16).astype(jnp.float32)
    w_bf = w.astype(jnp.bfloat16).astype(jnp.float32)
    ref_bf = x_bf @ w_bf.T + b
    assert jnp.allclose(out, ref_bf, atol=1e-3, rtol=1e-3)

    # Reference 2: full-f32 torch-equivalent math (loose tolerance for bf16 MXU inputs).
    ref_f32 = x @ w.T + b
    assert jnp.allclose(out, ref_f32, atol=2e-2, rtol=2e-2)


if __name__ == "__main__":
    key = jax.random.PRNGKey(0)
    k0, k1 = jax.random.split(key)
    _check(batch=8, num_class=10, key=k0)   # common classifier case, no padding
    _check(batch=5, num_class=10, key=k1)   # exercises batch padding (5 -> 8)
    print("KERNEL_OK")
</pallas_src>

<mosaic_0001>
module attributes {stable_mosaic.version = 11 : i64} {
  func.func @_fc_kernel(%arg0: i32, %arg1: i32, %arg2: memref<8x2048xf32, #tpu.memory_space<vmem>>, %arg3: memref<10x2048xf32, #tpu.memory_space<vmem>>, %arg4: memref<1x10xf32, #tpu.memory_space<vmem>>, %arg5: memref<8x10xf32, #tpu.memory_space<vmem>>) attributes {dimension_semantics = [#tpu.dimension_semantics<parallel>, #tpu.dimension_semantics<parallel>], iteration_bounds = array<i64: 1, 1>, scalar_prefetch = 0 : i64, scratch_operands = 0 : i64, tpu.core_type = #tpu.core_type<tc>, window_params = [{transform_indices = @transform_0, window_bounds = array<i64: 8, 2048>}, {transform_indices = @transform_1, window_bounds = array<i64: 10, 2048>}, {transform_indices = @transform_2, window_bounds = array<i64: 1, 10>}, {transform_indices = @transform_3, window_bounds = array<i64: 8, 10>}]} {
    %c0 = arith.constant 0 : index
    %c0_0 = arith.constant 0 : index
    %0 = vector.load %arg2[%c0, %c0_0] : memref<8x2048xf32, #tpu.memory_space<vmem>>, vector<8x2048xf32>
    %1 = arith.truncf %0 : vector<8x2048xf32> to vector<8x2048xbf16>
    %c0_1 = arith.constant 0 : index
    %c0_2 = arith.constant 0 : index
    %2 = vector.load %arg3[%c0_1, %c0_2] : memref<10x2048xf32, #tpu.memory_space<vmem>>, vector<10x2048xf32>
    %3 = arith.truncf %2 : vector<10x2048xf32> to vector<10x2048xbf16>
    %cst = arith.constant dense<0.000000e+00> : vector<8x10xf32>
    %4 = tpu.matmul %1, %3, %cst {dimension_numbers = #tpu.dot_dimension_numbers<[1], [1], [0], [0], [0, 0, 1, 0], [], []>} : vector<8x2048xbf16>, vector<10x2048xbf16>, vector<8x10xf32> -> vector<8x10xf32>
    %c0_3 = arith.constant 0 : index
    %c0_4 = arith.constant 0 : index
    %5 = vector.load %arg4[%c0_3, %c0_4] : memref<1x10xf32, #tpu.memory_space<vmem>>, vector<1x10xf32>
    %6 = vector.broadcast %5 : vector<1x10xf32> to vector<8x10xf32>
    %7 = arith.addf %4, %6 : vector<8x10xf32>
    %c0_5 = arith.constant 0 : index
    %c0_6 = arith.constant 0 : index
    %8 = vector.load %arg5[%c0_5, %c0_6] : memref<8x10xf32, #tpu.memory_space<vmem>>, vector<8x10xf32>
    tpu.vector_store %arg5[%c0_5, %c0_6], %7 {strides = array<i32>} : memref<8x10xf32, #tpu.memory_space<vmem>>, vector<8x10xf32>,
    return
  }
  func.func @transform_0(%arg0: i32, %arg1: i32) -> (i32, i32) {
    %c0_i32 = arith.constant 0 : i32
    %c0_i32_0 = arith.constant 0 : i32
    return %arg0, %c0_i32 : i32, i32
  }
  func.func @transform_1(%arg0: i32, %arg1: i32) -> (i32, i32) {
    %c0_i32 = arith.constant 0 : i32
    %c0_i32_0 = arith.constant 0 : i32
    return %arg1, %c0_i32 : i32, i32
  }
  func.func @transform_2(%arg0: i32, %arg1: i32) -> (i32, i32) {
    %c0_i32 = arith.constant 0 : i32
    %c0_i32_0 = arith.constant 0 : i32
    return %c0_i32, %arg1 : i32, i32
  }
  func.func @transform_3(%arg0: i32, %arg1: i32) -> (i32, i32) {
    %c0_i32 = arith.constant 0 : i32
    return %arg0, %arg1 : i32, i32
  }
}

</mosaic_0001>

<llo_original>
// kernel: fc_forward.1
$region0: #{fc_forward.1}
  #allocation0 [shape = 'u32[]', space=smem, size = 0x4, offset = 0x4, fixed_abs, tag = 'smem constant byte address 0x4 - core index']
  #allocation1 [shape = 'u32[144,128]{1,0:T(1,128)}', space=vmem, size = 0x12000, scoped, tag = 'internal scratch']
  %s0 = inlined_call_operand.hbm [shape: f32[8,2048], index: 0, kind: input, shape index: {}]
  %s1 = inlined_call_operand.hbm [shape: f32[10,2048], index: 1, kind: input, shape index: {}]
  %s2 = inlined_call_operand.vmem [shape: f32[1,10], index: 2, kind: input, shape index: {}]
  %s3 = inlined_call_operand.hbm [shape: f32[8,10], index: 3, kind: output, shape index: {}]
  %s4 = sld [smem:[#allocation0]]
  $region30: #{fc_forward.1} parent=0
    _
  %s6 = ssub.s32 1, %s4
  %s7 = scalar_select 0, %s6, %s4
  $region1: #{fc_forward.1} parent=0
    #allocation2 [shape = 'u8[65536]{0}', space=vmem, size = 0x10000, scoped, tag = 'input window, operand 0, single buffered']
    #allocation3 [shape = 's32[1]{0}', space=sflag, size = 0x4, scoped, tag = 'scoped memory for fc_forward.1']
    #allocation4 [shape = 's32[1]{0}', space=sflag, size = 0x4, scoped, tag = 'scoped memory for fc_forward.1']
    #allocation5 [shape = 'u8[131072]{0}', space=vmem, size = 0x20000, scoped, tag = 'input window, operand 1, single buffered']
    #allocation6 [shape = 's32[1]{0}', space=sflag, size = 0x4, scoped, tag = 'scoped memory for fc_forward.1']
    #allocation7 [shape = 'u8[4096]{0}', space=vmem, size = 0x1000, scoped, tag = 'output window, operand 0, single buffered']
    %8 = vsyncpa [#allocation3], 0
    %9 = vsyncpa [#allocation6], 0
    %10 = vsyncpa [#allocation4], 0
    // Predicated region
    $region2: #{fc_forward.1} parent=1 // pred_check
      _
    $region3: #{fc_forward.1} parent=1 // pred_check_branch
      %12 = sbr.rel (0) target = $region5
    $region4: #{fc_forward.1} parent=1 // pred_region
      %s14 = ssub.s32 2048, 2048
      %15 = vsyncadd [#allocation3], %s14
      %s17 = sshll.u32 [#allocation2], 4
      %s18 = int_to_ptr.vmem [resolvable:$true] %s17
      %20 = dma.hbm_to_vmem [thread:$0]  %s0, 2048, %s18, [#allocation3]
    $region5: #{fc_forward.1} parent=1 // pred_fallthru
      _
    // Predicated region
    $region6: #{fc_forward.1} parent=1 // pred_check
      _
    $region7: #{fc_forward.1} parent=1 // pred_check_branch
      %22 = sbr.rel (0) target = $region9
    $region8: #{fc_forward.1} parent=1 // pred_region
      %s24 = ssub.s32 4096, 4096
      %25 = vsyncadd [#allocation6], %s24
      %s26 = sshll.u32 [#allocation5], 4
      %s27 = int_to_ptr.vmem [resolvable:$true] %s26
      %32 = dma.hbm_to_vmem [thread:$0]  %s1, 4096, %s27, [#allocation6], 2048, 2048, 128
    $region9: #{fc_forward.1} parent=1 // pred_fallthru
      _
    // Predicated region
    $region10: #{fc_forward.1} parent=1 // pred_check
      _
    $region11: #{fc_forward.1} parent=1 // pred_check_branch
      %34 = sbr.rel (0) target = $region13
    $region12: #{fc_forward.1} parent=1 // pred_region
      _
    $region13: #{fc_forward.1} parent=1 // pred_fallthru
      _
    // Predicated region
    $region14: #{fc_forward.1} parent=1 // pred_check
      _
    $region15: #{fc_forward.1} parent=1 // pred_check_branch
      %36 = sbr.rel (0) target = $region17
    $region16: #{fc_forward.1} parent=1 // pred_region
      %37 = dma.done [#allocation3], 2048
    $region17: #{fc_forward.1} parent=1 // pred_fallthru
      _
    // Predicated region
    $region18: #{fc_forward.1} parent=1 // pred_check
      _
    $region19: #{fc_forward.1} parent=1 // pred_check_branch
      %39 = sbr.rel (0) target = $region21
    $region20: #{fc_forward.1} parent=1 // pred_region
      %40 = dma.done [#allocation6], 4096
    $region21: #{fc_forward.1} parent=1 // pred_fallthru
      _
    %v42 = vld [vmem:[#allocation2] sm:$0xff]
    %v43 = vld [vmem:[#allocation2 + $0x8] sm:$0xff]
    %v44 = vld [vmem:[#allocation2 + $0x10] sm:$0xff]
    %v45 = vld [vmem:[#allocation2 + $0x18] sm:$0xff]
    %v46 = vld [vmem:[#allocation2 + $0x20] sm:$0xff]
    %v47 = vld [vmem:[#allocation2 + $0x28] sm:$0xff]
    %v48 = vld [vmem:[#allocation2 + $0x30] sm:$0xff]
    %v49 = vld [vmem:[#allocation2 + $0x38] sm:$0xff]
    %v50 = vld [vmem:[#allocation2 + $0x40] sm:$0xff]
    %v51 = vld [vmem:[#allocation2 + $0x48] sm:$0xff]
    %v52 = vld [vmem:[#allocation2 + $0x50] sm:$0xff]
    %v53 = vld [vmem:[#allocation2 + $0x58] sm:$0xff]
    %v54 = vld [vmem:[#allocation2 + $0x60] sm:$0xff]
    %v55 = vld [vmem:[#allocation2 + $0x68] sm:$0xff]
    %v56 = vld [vmem:[#allocation2 + $0x70] sm:$0xff]
    %v57 = vld [vmem:[#allocation2 + $0x78] sm:$0xff]
    %v58 = vpack.c.bf16 %v42, %v42
    %v59 = vpack.c.bf16 %v43, %v43
    %v60 = vpack.c.bf16 %v44, %v44
    %v61 = vpack.c.bf16 %v45, %v45
    %v62 = vpack.c.bf16 %v46, %v46
    %v63 = vpack.c.bf16 %v47, %v47
    %v64 = vpack.c.bf16 %v48, %v48
    %v65 = vpack.c.bf16 %v49, %v49
    %v66 = vpack.c.bf16 %v50, %v50
    %v67 = vpack.c.bf16 %v51, %v51
    %v68 = vpack.c.bf16 %v52, %v52
    %v69 = vpack.c.bf16 %v53, %v53
    %v70 = vpack.c.bf16 %v54, %v54
    %v71 = vpack.c.bf16 %v55, %v55
    %v72 = vpack.c.bf16 %v56, %v56
    %v73 = vpack.c.bf16 %v57, %v57
    %v74 = vld [vmem:[#allocation5] sm:$0xff]
    %v75 = vld [vmem:[#allocation5 + $0x8] sm:$0xff]
    %v76 = vld [vmem:[#allocation5 + $0x10] sm:$0xff]
    %v77 = vld [vmem:[#allocation5 + $0x18] sm:$0xff]
    %v78 = vld [vmem:[#allocation5 + $0x20] sm:$0xff]
    %v79 = vld [vmem:[#allocation5 + $0x28] sm:$0xff]
    %v80 = vld [vmem:[#allocation5 + $0x30] sm:$0xff]
    %v81 = vld [vmem:[#allocation5 + $0x38] sm:$0xff]
    %v82 = vld [vmem:[#allocation5 + $0x40] sm:$0xff]
    %v83 = vld [vmem:[#allocation5 + $0x48] sm:$0xff]
    %v84 = vld [vmem:[#allocation5 + $0x50] sm:$0xff]
    %v85 = vld [vmem:[#allocation5 + $0x58] sm:$0xff]
    %v86 = vld [vmem:[#allocation5 + $0x60] sm:$0xff]
    %v87 = vld [vmem:[#allocation5 + $0x68] sm:$0xff]
    %v88 = vld [vmem:[#allocation5 + $0x70] sm:$0xff]
    %v89 = vld [vmem:[#allocation5 + $0x78] sm:$0xff]
    %v90 = vld [vmem:[#allocation5 + $0x80] sm:$0x3]
    %v91 = vld [vmem:[#allocation5 + $0x88] sm:$0x3]
    %v92 = vld [vmem:[#allocation5 + $0x90] sm:$0x3]
    %v93 = vld [vmem:[#allocation5 + $0x98] sm:$0x3]
    %v94 = vld [vmem:[#allocation5 + $0xa0] sm:$0x3]
    %v95 = vld [vmem:[#allocation5 + $0xa8] sm:$0x3]
    %v96 = vld [vmem:[#allocation5 + $0xb0] sm:$0x3]
    %v97 = vld [vmem:[#allocation5 + $0xb8] sm:$0x3]
    %v98 = vld [vmem:[#allocation5 + $0xc0] sm:$0x3]
    %v99 = vld [vmem:[#allocation5 + $0xc8] sm:$0x3]
    %v100 = vld [vmem:[#allocation5 + $0xd0] sm:$0x3]
    %v101 = vld [vmem:[#allocation5 + $0xd8] sm:$0x3]
    %v102 = vld [vmem:[#allocation5 + $0xe0] sm:$0x3]
    %v103 = vld [vmem:[#allocation5 + $0xe8] sm:$0x3]
    %v104 = vld [vmem:[#allocation5 + $0xf0] sm:$0x3]
    %v105 = vld [vmem:[#allocation5 + $0xf8] sm:$0x3]
    %v106 = vpack.c.bf16 %v90, %v74
    %v107 = vpack.c.bf16 %v91, %v75
    %v108 = vpack.c.bf16 %v92, %v76
    %v109 = vpack.c.bf16 %v93, %v77
    %v110 = vpack.c.bf16 %v94, %v78
    %v111 = vpack.c.bf16 %v95, %v79
    %v112 = vpack.c.bf16 %v96, %v80
    %v113 = vpack.c.bf16 %v97, %v81
    %v114 = vpack.c.bf16 %v98, %v82
    %v115 = vpack.c.bf16 %v99, %v83
    %v116 = vpack.c.bf16 %v100, %v84
    %v117 = vpack.c.bf16 %v101, %v85
    %v118 = vpack.c.bf16 %v102, %v86
    %v119 = vpack.c.bf16 %v103, %v87
    %v120 = vpack.c.bf16 %v104, %v88
    %v121 = vpack.c.bf16 %v105, %v89
    %v122 = vld [vmem:[%s2] sm:$0x1]
    %v124 = vlaneseq
    %v125 = vshrl.u32 %v124, 7
    %v126 = vsub.s32 0, %v125
    %v127 = vrot.slane %v122, %v126
    %129 = vmatprep.subr.bf16.mxu0 0
    %130 = vmatpush1.bf16.xpose.msra.mxu0 0
    %131 = vmatprep.subr.bf16.mxu0 0
    %132 = vmatpush1.bf16.xpose.msra.mxu0 0
    %133 = vmatprep.subr.bf16.mxu0 0
    %134 = vmatpush1.bf16.xpose.msra.mxu0 0
    %135 = vmatprep.subr.bf16.mxu0 0
    %136 = vmatpush1.bf16.xpose.msra.mxu0 0
    %137 = vmatprep.subr.bf16.mxu0 0
    %138 = vmatpush1.bf16.xpose.msra.mxu0 0
    %139 = vmatprep.subr.bf16.mxu0 0
    %140 = vmatpush1.bf16.xpose.msra.mxu0 0
    %141 = vmatprep.subr.bf16.mxu0 0
    %142 = vmatpush1.bf16.xpose.msra.mxu0 0
    %143 = vmatprep.subr.bf16.mxu0 %v107
    %144 = vmatpush1.bf16.xpose.msra.mxu0 %v106
    %145 = vmatprep.subr.bf16.mxu0 0
    %146 = vmatpush2.bf16.xpose.msra.mxu0 0
    %147 = vmatprep.subr.bf16.mxu0 0
    %148 = vmatpush2.bf16.xpose.msra.mxu0 0
    %149 = vmatprep.subr.bf16.mxu0 0
    %150 = vmatpush2.bf16.xpose.msra.mxu0 0
    %151 = vmatprep.subr.bf16.mxu0 0
    %152 = vmatpush2.bf16.xpose.msra.mxu0 0
    %153 = vmatprep.subr.bf16.mxu0 0
    %154 = vmatpush2.bf16.xpose.msra.mxu0 0
    %155 = vmatprep.subr.bf16.mxu0 0
    %156 = vmatpush2.bf16.xpose.msra.mxu0 0
    %157 = vmatprep.subr.bf16.mxu0 0
    %158 = vmatpush2.bf16.xpose.msra.mxu0 0
    %159 = vmatprep.subr.bf16.mxu0 0
    %160 = vmatpush2.bf16.xpose.msra.mxu0 0
    %161 = vmatprep.mubr.bf16.mxu0 %v59
    %162 = vmatmul.mubr.bf16.gmra.mxu0 %v58
    %v163 = vpop.f32.mrf.mxu0
    %v164 = vadd.f32 %v127, %v163
    %v165 = vpop.f32.mrf.mxu0
    %v166 = vpop.f32.mrf.mxu0
    %v167 = vpop.f32.mrf.mxu0
    %168 = vdwg.mxu0
    %169 = vmatprep.subr.bf16.mxu0 0
    %170 = vmatpush1.bf16.xpose.msra.mxu0 0
    %171 = vmatprep.subr.bf16.mxu0 0
    %172 = vmatpush1.bf16.xpose.msra.mxu0 0
    %173 = vmatprep.subr.bf16.mxu0 0
    %174 = vmatpush1.bf16.xpose.msra.mxu0 0
    %175 = vmatprep.subr.bf16.mxu0 0
    %176 = vmatpush1.bf16.xpose.msra.mxu0 0
    %177 = vmatprep.subr.bf16.mxu0 0
    %178 = vmatpush1.bf16.xpose.msra.mxu0 0
    %179 = vmatprep.subr.bf16.mxu0 0
    %180 = vmatpush1.bf16.xpose.msra.mxu0 0
    %181 = vmatprep.subr.bf16.mxu0 0
    %182 = vmatpush1.bf16.xpose.msra.mxu0 0
    %183 = vmatprep.subr.bf16.mxu0 %v109
    %184 = vmatpush1.bf16.xpose.msra.mxu0 %v108
    %185 = vmatprep.subr.bf16.mxu0 0
    %186 = vmatpush2.bf16.xpose.msra.mxu0 0
    %187 = vmatprep.subr.bf16.mxu0 0
    %188 = vmatpush2.bf16.xpose.msra.mxu0 0
    %189 = vmatprep.subr.bf16.mxu0 0
    %190 = vmatpush2.bf16.xpose.msra.mxu0 0
    %191 = vmatprep.subr.bf16.mxu0 0
    %192 = vmatpush2.bf16.xpose.msra.mxu0 0
    %193 = vmatprep.subr.bf16.mxu0 0
    %194 = vmatpush2.bf16.xpose.msra.mxu0 0
    %195 = vmatprep.subr.bf16.mxu0 0
    %196 = vmatpush2.bf16.xpose.msra.mxu0 0
    %197 = vmatprep.subr.bf16.mxu0 0
    %198 = vmatpush2.bf16.xpose.msra.mxu0 0
    %199 = vmatprep.subr.bf16.mxu0 0
    %200 = vmatpush2.bf16.xpose.msra.mxu0 0
    %201 = vmatprep.mubr.bf16.mxu0 %v61
    %202 = vmatmul.mubr.bf16.gmra.mxu0 %v60
    %v203 = vpop.f32.mrf.mxu0
    %v204 = vadd.f32 %v164, %v203
    %v205 = vpop.f32.mrf.mxu0
    %v206 = vpop.f32.mrf.mxu0
    %v207 = vpop.f32.mrf.mxu0
    %208 = vdwg.mxu0
    %209 = vmatprep.subr.bf16.mxu0 0
    %210 = vmatpush1.bf16.xpose.msra.mxu0 0
    %211 = vmatprep.subr.bf16.mxu0 0
    %212 = vmatpush1.bf16.xpose.msra.mxu0 0
    %213 = vmatprep.subr.bf16.mxu0 0
    %214 = vmatpush1.bf16.xpose.msra.mxu0 0
    %215 = vmatprep.subr.bf16.mxu0 0
    %216 = vmatpush1.bf16.xpose.msra.mxu0 0
    %217 = vmatprep.subr.bf16.mxu0 0
    %218 = vmatpush1.bf16.xpose.msra.mxu0 0
    %219 = vmatprep.subr.bf16.mxu0 0
    %220 = vmatpush1.bf16.xpose.msra.mxu0 0
    %221 = vmatprep.subr.bf16.mxu0 0
    %222 = vmatpush1.bf16.xpose.msra.mxu0 0
    %223 = vmatprep.subr.bf16.mxu0 %v111
    %224 = vmatpush1.bf16.xpose.msra.mxu0 %v110
    %225 = vmatprep.subr.bf16.mxu0 0
    %226 = vmatpush2.bf16.xpose.msra.mxu0 0
    %227 = vmatprep.subr.bf16.mxu0 0
    %228 = vmatpush2.bf16.xpose.msra.mxu0 0
    %229 = vmatprep.subr.bf16.mxu0 0
    %230 = vmatpush2.bf16.xpose.msra.mxu0 0
    %231 = vmatprep.subr.bf16.mxu0 0
    %232 = vmatpush2.bf16.xpose.msra.mxu0 0
    %233 = vmatprep.subr.bf16.mxu0 0
    %234 = vmatpush2.bf16.xpose.msra.mxu0 0
    %235 = vmatprep.subr.bf16.mxu0 0
    %236 = vmatpush2.bf16.xpose.msra.mxu0 0
    %237 = vmatprep.subr.bf16.mxu0 0
    %238 = vmatpush2.bf16.xpose.msra.mxu0 0
    %239 = vmatprep.subr.bf16.mxu0 0
    %240 = vmatpush2.bf16.xpose.msra.mxu0 0
    %241 = vmatprep.mubr.bf16.mxu0 %v63
    %242 = vmatmul.mubr.bf16.gmra.mxu0 %v62
    %v243 = vpop.f32.mrf.mxu0
    %v244 = vadd.f32 %v204, %v243
    %v245 = vpop.f32.mrf.mxu0
    %v246 = vpop.f32.mrf.mxu0
    %v247 = vpop.f32.mrf.mxu0
    %248 = vdwg.mxu0
    %249 = vmatprep.subr.bf16.mxu0 0
    %250 = vmatpush1.bf16.xpose.msra.mxu0 0
    %251 = vmatprep.subr.bf16.mxu0 0
    %252 = vmatpush1.bf16.xpose.msra.mxu0 0
    %253 = vmatprep.subr.bf16.mxu0 0
    %254 = vmatpush1.bf16.xpose.msra.mxu0 0
    %255 = vmatprep.subr.bf16.mxu0 0
    %256 = vmatpush1.bf16.xpose.msra.mxu0 0
    %257 = vmatprep.subr.bf16.mxu0 0
    %258 = vmatpush1.bf16.xpose.msra.mxu0 0
    %259 = vmatprep.subr.bf16.mxu0 0
    %260 = vmatpush1.bf16.xpose.msra.mxu0 0
    %261 = vmatprep.subr.bf16.mxu0 0
    %262 = vmatpush1.bf16.xpose.msra.mxu0 0
    %263 = vmatprep.subr.bf16.mxu0 %v113
    %264 = vmatpush1.bf16.xpose.msra.mxu0 %v112
    %265 = vmatprep.subr.bf16.mxu0 0
    %266 = vmatpush2.bf16.xpose.msra.mxu0 0
    %267 = vmatprep.subr.bf16.mxu0 0
    %268 = vmatpush2.bf16.xpose.msra.mxu0 0
    %269 = vmatprep.subr.bf16.mxu0 0
    %270 = vmatpush2.bf16.xpose.msra.mxu0 0
    %271 = vmatprep.subr.bf16.mxu0 0
    %272 = vmatpush2.bf16.xpose.msra.mxu0 0
    %273 = vmatprep.subr.bf16.mxu0 0
    %274 = vmatpush2.bf16.xpose.msra.mxu0 0
    %275 = vmatprep.subr.bf16.mxu0 0
    %276 = vmatpush2.bf16.xpose.msra.mxu0 0
    %277 = vmatprep.subr.bf16.mxu0 0
    %278 = vmatpush2.bf16.xpose.msra.mxu0 0
    %279 = vmatprep.subr.bf16.mxu0 0
    %280 = vmatpush2.bf16.xpose.msra.mxu0 0
    %281 = vmatprep.mubr.bf16.mxu0 %v65
    %282 = vmatmul.mubr.bf16.gmra.mxu0 %v64
    %v283 = vpop.f32.mrf.mxu0
    %v284 = vadd.f32 %v244, %v283
    %v285 = vpop.f32.mrf.mxu0
    %v286 = vpop.f32.mrf.mxu0
    %v287 = vpop.f32.mrf.mxu0
    %288 = vdwg.mxu0
    %289 = vmatprep.subr.bf16.mxu0 0
    %290 = vmatpush1.bf16.xpose.msra.mxu0 0
    %291 = vmatprep.subr.bf16.mxu0 0
    %292 = vmatpush1.bf16.xpose.msra.mxu0 0
    %293 = vmatprep.subr.bf16.mxu0 0
    %294 = vmatpush1.bf16.xpose.msra.mxu0 0
    %295 = vmatprep.subr.bf16.mxu0 0
    %296 = vmatpush1.bf16.xpose.msra.mxu0 0
    %297 = vmatprep.subr.bf16.mxu0 0
    %298 = vmatpush1.bf16.xpose.msra.mxu0 0
    %299 = vmatprep.subr.bf16.mxu0 0
    %300 = vmatpush1.bf16.xpose.msra.mxu0 0
    %301 = vmatprep.subr.bf16.mxu0 0
    %302 = vmatpush1.bf16.xpose.msra.mxu0 0
    %303 = vmatprep.subr.bf16.mxu0 %v115
    %304 = vmatpush1.bf16.xpose.msra.mxu0 %v114
    %305 = vmatprep.subr.bf16.mxu0 0
    %306 = vmatpush2.bf16.xpose.msra.mxu0 0
    %307 = vmatprep.subr.bf16.mxu0 0
    %308 = vmatpush2.bf16.xpose.msra.mxu0 0
    %309 = vmatprep.subr.bf16.mxu0 0
    %310 = vmatpush2.bf16.xpose.msra.mxu0 0
    %311 = vmatprep.subr.bf16.mxu0 0
    %312 = vmatpush2.bf16.xpose.msra.mxu0 0
    %313 = vmatprep.subr.bf16.mxu0 0
    %314 = vmatpush2.bf16.xpose.msra.mxu0 0
    %315 = vmatprep.subr.bf16.mxu0 0
    %316 = vmatpush2.bf16.xpose.msra.mxu0 0
    %317 = vmatprep.subr.bf16.mxu0 0
    %318 = vmatpush2.bf16.xpose.msra.mxu0 0
    %319 = vmatprep.subr.bf16.mxu0 0
    %320 = vmatpush2.bf16.xpose.msra.mxu0 0
    %321 = vmatprep.mubr.bf16.mxu0 %v67
    %322 = vmatmul.mubr.bf16.gmra.mxu0 %v66
    %v323 = vpop.f32.mrf.mxu0
    %v324 = vadd.f32 %v284, %v323
    %v325 = vpop.f32.mrf.mxu0
    %v326 = vpop.f32.mrf.mxu0
    %v327 = vpop.f32.mrf.mxu0
    %328 = vdwg.mxu0
    %329 = vmatprep.subr.bf16.mxu0 0
    %330 = vmatpush1.bf16.xpose.msra.mxu0 0
    %331 = vmatprep.subr.bf16.mxu0 0
    %332 = vmatpush1.bf16.xpose.msra.mxu0 0
    %333 = vmatprep.subr.bf16.mxu0 0
    %334 = vmatpush1.bf16.xpose.msra.mxu0 0
    %335 = vmatprep.subr.bf16.mxu0 0
    %336 = vmatpush1.bf16.xpose.msra.mxu0 0
    %337 = vmatprep.subr.bf16.mxu0 0
    %338 = vmatpush1.bf16.xpose.msra.mxu0 0
    %339 = vmatprep.subr.bf16.mxu0 0
    %340 = vmatpush1.bf16.xpose.msra.mxu0 0
    %341 = vmatprep.subr.bf16.mxu0 0
    %342 = vmatpush1.bf16.xpose.msra.mxu0 0
    %343 = vmatprep.subr.bf16.mxu0 %v117
    %344 = vmatpush1.bf16.xpose.msra.mxu0 %v116
    %345 = vmatprep.subr.bf16.mxu0 0
    %346 = vmatpush2.bf16.xpose.msra.mxu0 0
    %347 = vmatprep.subr.bf16.mxu0 0
    %348 = vmatpush2.bf16.xpose.msra.mxu0 0
    %349 = vmatprep.subr.bf16.mxu0 0
    %350 = vmatpush2.bf16.xpose.msra.mxu0 0
    %351 = vmatprep.subr.bf16.mxu0 0
    %352 = vmatpush2.bf16.xpose.msra.mxu0 0
    %353 = vmatprep.subr.bf16.mxu0 0
    %354 = vmatpush2.bf16.xpose.msra.mxu0 0
    %355 = vmatprep.subr.bf16.mxu0 0
    %356 = vmatpush2.bf16.xpose.msra.mxu0 0
    %357 = vmatprep.subr.bf16.mxu0 0
    %358 = vmatpush2.bf16.xpose.msra.mxu0 0
    %359 = vmatprep.subr.bf16.mxu0 0
    %360 = vmatpush2.bf16.xpose.msra.mxu0 0
    %361 = vmatprep.mubr.bf16.mxu0 %v69
    %362 = vmatmul.mubr.bf16.gmra.mxu0 %v68
    %v363 = vpop.f32.mrf.mxu0
    %v364 = vadd.f32 %v324, %v363
    %v365 = vpop.f32.mrf.mxu0
    %v366 = vpop.f32.mrf.mxu0
    %v367 = vpop.f32.mrf.mxu0
    %368 = vdwg.mxu0
    %369 = vmatprep.subr.bf16.mxu0 0
    %370 = vmatpush1.bf16.xpose.msra.mxu0 0
    %371 = vmatprep.subr.bf16.mxu0 0
    %372 = vmatpush1.bf16.xpose.msra.mxu0 0
    %373 = vmatprep.subr.bf16.mxu0 0
    %374 = vmatpush1.bf16.xpose.msra.mxu0 0
    %375 = vmatprep.subr.bf16.mxu0 0
    %376 = vmatpush1.bf16.xpose.msra.mxu0 0
    %377 = vmatprep.subr.bf16.mxu0 0
    %378 = vmatpush1.bf16.xpose.msra.mxu0 0
    %379 = vmatprep.subr.bf16.mxu0 0
    %380 = vmatpush1.bf16.xpose.msra.mxu0 0
    %381 = vmatprep.subr.bf16.mxu0 0
    %382 = vmatpush1.bf16.xpose.msra.mxu0 0
    %383 = vmatprep.subr.bf16.mxu0 %v119
    %384 = vmatpush1.bf16.xpose.msra.mxu0 %v118
    %385 = vmatprep.subr.bf16.mxu0 0
    %386 = vmatpush2.bf16.xpose.msra.mxu0 0
    %387 = vmatprep.subr.bf16.mxu0 0
    %388 = vmatpush2.bf16.xpose.msra.mxu0 0
    %389 = vmatprep.subr.bf16.mxu0 0
    %390 = vmatpush2.bf16.xpose.msra.mxu0 0
    %391 = vmatprep.subr.bf16.mxu0 0
    %392 = vmatpush2.bf16.xpose.msra.mxu0 0
    %393 = vmatprep.subr.bf16.mxu0 0
    %394 = vmatpush2.bf16.xpose.msra.mxu0 0
    %395 = vmatprep.subr.bf16.mxu0 0
    %396 = vmatpush2.bf16.xpose.msra.mxu0 0
    %397 = vmatprep.subr.bf16.mxu0 0
    %398 = vmatpush2.bf16.xpose.msra.mxu0 0
    %399 = vmatprep.subr.bf16.mxu0 0
    %400 = vmatpush2.bf16.xpose.msra.mxu0 0
    %401 = vmatprep.mubr.bf16.mxu0 %v71
    %402 = vmatmul.mubr.bf16.gmra.mxu0 %v70
    %v403 = vpop.f32.mrf.mxu0
    %v404 = vadd.f32 %v364, %v403
    %v405 = vpop.f32.mrf.mxu0
    %v406 = vpop.f32.mrf.mxu0
    %v407 = vpop.f32.mrf.mxu0
    %408 = vdwg.mxu0
    %409 = vmatprep.subr.bf16.mxu0 0
    %410 = vmatpush1.bf16.xpose.msra.mxu0 0
    %411 = vmatprep.subr.bf16.mxu0 0
    %412 = vmatpush1.bf16.xpose.msra.mxu0 0
    %413 = vmatprep.subr.bf16.mxu0 0
    %414 = vmatpush1.bf16.xpose.msra.mxu0 0
    %415 = vmatprep.subr.bf16.mxu0 0
    %416 = vmatpush1.bf16.xpose.msra.mxu0 0
    %417 = vmatprep.subr.bf16.mxu0 0
    %418 = vmatpush1.bf16.xpose.msra.mxu0 0
    %419 = vmatprep.subr.bf16.mxu0 0
    %420 = vmatpush1.bf16.xpose.msra.mxu0 0
    %421 = vmatprep.subr.bf16.mxu0 0
    %422 = vmatpush1.bf16.xpose.msra.mxu0 0
    %423 = vmatprep.subr.bf16.mxu0 %v121
    %424 = vmatpush1.bf16.xpose.msra.mxu0 %v120
    %425 = vmatprep.subr.bf16.mxu0 0
    %426 = vmatpush2.bf16.xpose.msra.mxu0 0
    %427 = vmatprep.subr.bf16.mxu0 0
    %428 = vmatpush2.bf16.xpose.msra.mxu0 0
    %429 = vmatprep.subr.bf16.mxu0 0
    %430 = vmatpush2.bf16.xpose.msra.mxu0 0
    %431 = vmatprep.subr.bf16.mxu0 0
    %432 = vmatpush2.bf16.xpose.msra.mxu0 0
    %433 = vmatprep.subr.bf16.mxu0 0
    %434 = vmatpush2.bf16.xpose.msra.mxu0 0
    %435 = vmatprep.subr.bf16.mxu0 0
    %436 = vmatpush2.bf16.xpose.msra.mxu0 0
    %437 = vmatprep.subr.bf16.mxu0 0
    %438 = vmatpush2.bf16.xpose.msra.mxu0 0
    %439 = vmatprep.subr.bf16.mxu0 0
    %440 = vmatpush2.bf16.xpose.msra.mxu0 0
    %441 = vmatprep.mubr.bf16.mxu0 %v73
    %442 = vmatmul.mubr.bf16.gmra.mxu0 %v72
    %v443 = vpop.f32.mrf.mxu0
    %v444 = vadd.f32 %v404, %v443
    %v445 = vpop.f32.mrf.mxu0
    %v446 = vpop.f32.mrf.mxu0
    %v447 = vpop.f32.mrf.mxu0
    %448 = vdwg.mxu0
    %vm449 = vcmask 80896
    %450 = vst.msk [vmem:[#allocation7] sm:$0xff] %vm449, %v444
    // Predicated region
    $region22: #{fc_forward.1} parent=1 // pred_check
      _
    $region23: #{fc_forward.1} parent=1 // pred_check_branch
      %452 = sbr.rel (0) target = $region25
    $region24: #{fc_forward.1} parent=1 // pred_region
      %s454 = ssub.s32 128, 128
      %455 = vsyncadd [#allocation4], %s454
      %s457 = sshll.u32 [#allocation7], 4
      %s458 = int_to_ptr.vmem [resolvable:$true] %s457
      %460 = dma.vmem_to_hbm [thread:$0]  %s458, 128, %s3, [#allocation4]
    $region25: #{fc_forward.1} parent=1 // pred_fallthru
      _
    // Predicated region
    $region26: #{fc_forward.1} parent=1 // pred_check
      _
    $region27: #{fc_forward.1} parent=1 // pred_check_branch
      %462 = sbr.rel (0) target = $region29
    $region28: #{fc_forward.1} parent=1 // pred_region
      %463 = dma.done [#allocation4], 128
    $region29: #{fc_forward.1} parent=1 // pred_fallthru
      _
    %464 = vsyncpa [#allocation3], 1
    %465 = vsyncpa [#allocation6], 1
    %466 = vsyncpa [#allocation4], 1

</llo_original>
